<compile_context>
chip_gen: v5e
topology: v5e:2x2
jax: 0.10.0
libtpu: 0.0.40
codegen_flags: <defaults>
</compile_context>

<pallas_src>
import functools

import jax
import jax.numpy as jnp
from jax import lax
from jax.experimental import pallas as pl
from jax.experimental.pallas import tpu as pltpu

_LANES = 128
_SUB_CHUNKS = 8           # 8 * 128 = 1024 lanes per fori_loop sub-tile
_SMOOTH = 0.001


def _make_kernel(f_valid, need_mask):
    """grid = (batch_blocks, f_blocks); accumulates along grid axis 1 (F)."""

    def kernel(logits_ref, targets_ref, score_ref, inter_acc, sum_acc):
        k = pl.program_id(1)

        @pl.when(k == 0)
        def _init():
            inter_acc[...] = jnp.zeros_like(inter_acc)
            sum_acc[...] = jnp.zeros_like(sum_acc)

        nb, tf = logits_ref.shape

        if need_mask:
            lane_iota = lax.broadcasted_iota(jnp.int32, (nb, _LANES), 1)
            col0 = k * tf  # global column index of this tile's first lane

        def chunk(off, acc_i, acc_s):
            # off: lane offset within the tile (static int or traced, x128).
            start = off if isinstance(off, int) else pl.multiple_of(off, _LANES)
            sl = pl.ds(start, _LANES)
            # Exact sigmoid (EUP exp + divide); kernel is HBM-bound so the
            # extra precision is free and keeps the tolerance check tight.
            p = jax.nn.sigmoid(logits_ref[:, sl].astype(jnp.float32))
            t = targets_ref[:, sl].astype(jnp.float32)
            if need_mask:
                valid = (col0 + off + lane_iota) < f_valid
                p = jnp.where(valid, p, 0.0)
                t = jnp.where(valid, t, 0.0)
            return acc_i + p * t, acc_s + (p + t)

        acc_i = inter_acc[...]
        acc_s = sum_acc[...]
        n_chunks = tf // _LANES

        if n_chunks <= _SUB_CHUNKS:
            # Small tile: fully unrolled 128-lane chunks.
            for c in range(n_chunks):
                acc_i, acc_s = chunk(c * _LANES, acc_i, acc_s)
        else:
            # Large tile (tf is a multiple of 1024 by construction): rolled
            # fori_loop over 1024-lane sub-tiles, 2 independent accumulator
            # pairs inside the unrolled body for ILP.
            n_sub = n_chunks // _SUB_CHUNKS
            zero = jnp.zeros_like(acc_i)

            def body(s, carry):
                ai0, as0, ai1, as1 = carry
                base = s * (_SUB_CHUNKS * _LANES)
                for c in range(0, _SUB_CHUNKS, 2):
                    ai0, as0 = chunk(base + c * _LANES, ai0, as0)
                    ai1, as1 = chunk(base + (c + 1) * _LANES, ai1, as1)
                return ai0, as0, ai1, as1

            ai0, as0, ai1, as1 = lax.fori_loop(
                0, n_sub, body, (acc_i, acc_s, zero, zero))
            acc_i = ai0 + ai1
            acc_s = as0 + as1

        inter_acc[...] = acc_i
        sum_acc[...] = acc_s

        @pl.when(k == pl.num_programs(1) - 1)
        def _finalize():
            smooth = jnp.float32(_SMOOTH)
            inter = jnp.sum(inter_acc[...], axis=1, keepdims=True)  # (NB,1) XLU
            denom = jnp.sum(sum_acc[...], axis=1, keepdims=True)    # (NB,1) XLU
            score_ref[...] = 2.0 * (inter + smooth) / (denom + smooth)

    return kernel


def _chip_budgets():
    """(double-buffered input budget, vmem_limit cap) per TPU generation."""
    try:
        info = pltpu.get_tpu_info()
        vmem_bytes = int(getattr(info, "vmem_capacity_bytes", 64 << 20))
    except Exception:  # pragma: no cover - conservative fallback
        vmem_bytes = 64 << 20
    if vmem_bytes >= (100 << 20):          # v5e / v6e: 128 MiB physical VMEM
        return 28 << 20, 64 << 20
    return 22 << 20, 36 << 20              # v7x: 64 MiB per TC, keep headroom


def _pick_nb(num, il, it, f_row_bytes):
    """Batch tile: dtype-packing aware, >=2 parallel blocks when possible."""
    sub = min(il, it)
    min_nb = {1: 32, 2: 16}.get(sub, 8)    # sub-32-bit dtypes pack sublanes
    if num <= min_nb:
        return num                          # single block == full batch dim
    # Largest multiple of min_nb that still leaves >= 2 blocks on the
    # "parallel" batch axis (v7x has 2 TensorCores per chip).
    max_nb = max(min_nb, (num // 2) // min_nb * min_nb)
    nb = min_nb
    target_step_bytes = 4 << 20
    while nb * 2 <= max_nb and nb * f_row_bytes < target_step_bytes:
        nb *= 2
    return nb


def soft_dice_loss(logits, targets):
    """Soft dice loss matching PyTorch SoftDiceLoss.forward semantics."""
    num = logits.shape[0]
    m1 = logits.reshape(num, -1)           # native dtype, no wrapper astype
    m2 = targets.reshape(num, -1)
    f = m1.shape[1]

    il = jnp.dtype(m1.dtype).itemsize
    it = jnp.dtype(m2.dtype).itemsize

    budget, vmem_cap = _chip_budgets()

    f_pad128 = ((f + _LANES - 1) // _LANES) * _LANES
    nb = _pick_nb(num, il, it, f_pad128 * (il + it))

    # F tile: largest lane-aligned tile whose double-buffered input footprint
    # fits the chip budget; multiples of 1024 once large so the in-kernel
    # fori_loop sub-tiling divides evenly.  No wrapper padding: the last
    # (partial) tile is masked in-kernel.
    per_col = 2 * nb * (il + it)            # 2 pipeline buffers per input
    tf = min(f_pad128, max(_LANES, (budget // per_col) // _LANES * _LANES))
    if tf >= _SUB_CHUNKS * _LANES:
        tf = tf // (_SUB_CHUNKS * _LANES) * (_SUB_CHUNKS * _LANES)

    grid = (pl.cdiv(num, nb), pl.cdiv(f, tf))
    need_mask = (f % tf) != 0

    in_bytes = 2 * nb * tf * (il + it)
    scratch_bytes = 2 * nb * _LANES * 4
    vmem_limit = int(min(vmem_cap,
                         max(16 << 20, in_bytes + scratch_bytes + (2 << 20))))

    # TODO(synk): if profiling shows exposed DMA, add pipeline_mode=pl.Buffered(3)
    # on the two input specs (and budget a third buffer) — skipped by default to
    # preserve v7x VMEM headroom.
    scores = pl.pallas_call(
        _make_kernel(f, need_mask),
        out_shape=jax.ShapeDtypeStruct((num, 1), jnp.float32),
        grid_spec=pltpu.PrefetchScalarGridSpec(
            num_scalar_prefetch=0,
            grid=grid,
            in_specs=[
                pl.BlockSpec((nb, tf), lambda b, k: (b, k)),
                pl.BlockSpec((nb, tf), lambda b, k: (b, k)),
            ],
            out_specs=pl.BlockSpec((nb, 1), lambda b, k: (b, 0)),
            scratch_shapes=[
                pltpu.VMEM((nb, _LANES), jnp.float32),  # intersection partials
                pltpu.VMEM((nb, _LANES), jnp.float32),  # (probs + targets) partials
            ],
        ),
        compiler_params=pltpu.CompilerParams(
            dimension_semantics=("parallel", "arbitrary"),
            vmem_limit_bytes=vmem_limit,
        ),
        cost_estimate=pl.CostEstimate(
            flops=5 * num * f,
            transcendentals=num * f,
            bytes_accessed=num * f * (il + it) + num * 4,
        ),
    )(m1, m2)

    return 1.0 - jnp.sum(scores) / num


def _reference(logits, targets):
    num = logits.shape[0]
    smooth = 0.001
    probs = jax.nn.sigmoid(logits.astype(jnp.float32))
    m1 = probs.reshape(num, -1)
    m2 = targets.reshape(num, -1).astype(jnp.float32)
    inter = (m1 * m2).sum(1)
    score = 2.0 * (inter + smooth) / (m1.sum(1) + m2.sum(1) + smooth)
    return 1.0 - score.sum() / num


if __name__ == "__main__":
    key = jax.random.PRNGKey(0)
    k1, k2, k3, k4 = jax.random.split(key, 4)

    # NCHW logits and binary targets (batch=2, channels=4, spatial=16x16).
    logits = jax.random.normal(k1, (2, 4, 16, 16), dtype=jnp.float32)
    targets = (jax.random.uniform(k2, (2, 4, 16, 16)) > 0.5).astype(jnp.float32)

    loss = jax.block_until_ready(soft_dice_loss(logits, targets))
    ref = _reference(logits, targets)
    assert jnp.allclose(loss, ref, atol=1e-5, rtol=1e-5), (loss, ref)

    # Lane-unaligned flattened size (3*10*10 = 300) exercises the in-kernel
    # masking path (no wrapper padding).
    logits2 = jax.random.normal(k3, (3, 3, 10, 10), dtype=jnp.float32)
    targets2 = (jax.random.uniform(k4, (3, 3, 10, 10)) > 0.5).astype(jnp.float32)

    loss2 = jax.block_until_ready(soft_dice_loss(logits2, targets2))
    ref2 = _reference(logits2, targets2)
    assert jnp.allclose(loss2, ref2, atol=1e-5, rtol=1e-5), (loss2, ref2)

    print("KERNEL_OK")
</pallas_src>

<mosaic_0001>
module attributes {stable_mosaic.version = 11 : i64} {
  func.func @kernel(%arg0: i32, %arg1: i32, %arg2: memref<2x1024xf32, #tpu.memory_space<vmem>>, %arg3: memref<2x1024xf32, #tpu.memory_space<vmem>>, %arg4: memref<2x1xf32, #tpu.memory_space<vmem>>, %arg5: memref<2x128xf32, #tpu.memory_space<vmem>>, %arg6: memref<2x128xf32, #tpu.memory_space<vmem>>) attributes {dimension_semantics = [#tpu.dimension_semantics<parallel>, #tpu.dimension_semantics<arbitrary>], iteration_bounds = array<i64: 1, 1>, scalar_prefetch = 0 : i64, scratch_operands = 2 : i64, tpu.core_type = #tpu.core_type<tc>, window_params = [{transform_indices = @transform_0, window_bounds = array<i64: 2, 1024>}, {transform_indices = @transform_1, window_bounds = array<i64: 2, 1024>}, {transform_indices = @transform_2, window_bounds = array<i64: 2, 1>}]} {
    %c0_i32 = arith.constant 0 : i32
    %0 = arith.cmpi eq, %arg1, %c0_i32 : i32
    %1 = arith.extui %0 : i1 to i32
    %c0_i32_0 = arith.constant 0 : i32
    %2 = arith.cmpi ne, %1, %c0_i32_0 : i32
    scf.if %2 {
      %cst_42 = arith.constant 0.000000e+00 : f32
      %98 = vector.broadcast %cst_42 : f32 to vector<2x128xf32>
      %c0_43 = arith.constant 0 : index
      %c0_44 = arith.constant 0 : index
      %99 = vector.load %arg5[%c0_43, %c0_44] : memref<2x128xf32, #tpu.memory_space<vmem>>, vector<2x128xf32>
      tpu.vector_store %arg5[%c0_43, %c0_44], %98 {strides = array<i32>} : memref<2x128xf32, #tpu.memory_space<vmem>>, vector<2x128xf32>,
      %cst_45 = arith.constant 0.000000e+00 : f32
      %100 = vector.broadcast %cst_45 : f32 to vector<2x128xf32>
      %c0_46 = arith.constant 0 : index
      %c0_47 = arith.constant 0 : index
      %101 = vector.load %arg6[%c0_46, %c0_47] : memref<2x128xf32, #tpu.memory_space<vmem>>, vector<2x128xf32>
      tpu.vector_store %arg6[%c0_46, %c0_47], %100 {strides = array<i32>} : memref<2x128xf32, #tpu.memory_space<vmem>>, vector<2x128xf32>,
    } else {
    }
    %c0 = arith.constant 0 : index
    %c0_1 = arith.constant 0 : index
    %3 = vector.load %arg5[%c0, %c0_1] : memref<2x128xf32, #tpu.memory_space<vmem>>, vector<2x128xf32>
    %c0_2 = arith.constant 0 : index
    %c0_3 = arith.constant 0 : index
    %4 = vector.load %arg6[%c0_2, %c0_3] : memref<2x128xf32, #tpu.memory_space<vmem>>, vector<2x128xf32>
    %c0_4 = arith.constant 0 : index
    %c0_5 = arith.constant 0 : index
    %5 = vector.load %arg2[%c0_4, %c0_5] : memref<2x1024xf32, #tpu.memory_space<vmem>>, vector<2x128xf32>
    %6 = arith.negf %5 : vector<2x128xf32>
    %7 = math.exp %6 : vector<2x128xf32>
    %cst = arith.constant 1.000000e+00 : f32
    %8 = vector.broadcast %cst : f32 to vector<2x128xf32>
    %9 = arith.addf %8, %7 : vector<2x128xf32>
    %10 = arith.divf %8, %9 : vector<2x128xf32>
    %c0_6 = arith.constant 0 : index
    %c0_7 = arith.constant 0 : index
    %11 = vector.load %arg3[%c0_6, %c0_7] : memref<2x1024xf32, #tpu.memory_space<vmem>>, vector<2x128xf32>
    %12 = arith.mulf %10, %11 : vector<2x128xf32>
    %13 = arith.addf %3, %12 : vector<2x128xf32>
    %14 = arith.addf %10, %11 : vector<2x128xf32>
    %15 = arith.addf %4, %14 : vector<2x128xf32>
    %c0_8 = arith.constant 0 : index
    %c128 = arith.constant 128 : index
    %16 = vector.load %arg2[%c0_8, %c128] : memref<2x1024xf32, #tpu.memory_space<vmem>>, vector<2x128xf32>
    %17 = arith.negf %16 : vector<2x128xf32>
    %18 = math.exp %17 : vector<2x128xf32>
    %cst_9 = arith.constant 1.000000e+00 : f32
    %19 = vector.broadcast %cst_9 : f32 to vector<2x128xf32>
    %20 = arith.addf %19, %18 : vector<2x128xf32>
    %21 = arith.divf %19, %20 : vector<2x128xf32>
    %c0_10 = arith.constant 0 : index
    %c128_11 = arith.constant 128 : index
    %22 = vector.load %arg3[%c0_10, %c128_11] : memref<2x1024xf32, #tpu.memory_space<vmem>>, vector<2x128xf32>
    %23 = arith.mulf %21, %22 : vector<2x128xf32>
    %24 = arith.addf %13, %23 : vector<2x128xf32>
    %25 = arith.addf %21, %22 : vector<2x128xf32>
    %26 = arith.addf %15, %25 : vector<2x128xf32>
    %c0_12 = arith.constant 0 : index
    %c256 = arith.constant 256 : index
    %27 = vector.load %arg2[%c0_12, %c256] : memref<2x1024xf32, #tpu.memory_space<vmem>>, vector<2x128xf32>
    %28 = arith.negf %27 : vector<2x128xf32>
    %29 = math.exp %28 : vector<2x128xf32>
    %cst_13 = arith.constant 1.000000e+00 : f32
    %30 = vector.broadcast %cst_13 : f32 to vector<2x128xf32>
    %31 = arith.addf %30, %29 : vector<2x128xf32>
    %32 = arith.divf %30, %31 : vector<2x128xf32>
    %c0_14 = arith.constant 0 : index
    %c256_15 = arith.constant 256 : index
    %33 = vector.load %arg3[%c0_14, %c256_15] : memref<2x1024xf32, #tpu.memory_space<vmem>>, vector<2x128xf32>
    %34 = arith.mulf %32, %33 : vector<2x128xf32>
    %35 = arith.addf %24, %34 : vector<2x128xf32>
    %36 = arith.addf %32, %33 : vector<2x128xf32>
    %37 = arith.addf %26, %36 : vector<2x128xf32>
    %c0_16 = arith.constant 0 : index
    %c384 = arith.constant 384 : index
    %38 = vector.load %arg2[%c0_16, %c384] : memref<2x1024xf32, #tpu.memory_space<vmem>>, vector<2x128xf32>
    %39 = arith.negf %38 : vector<2x128xf32>
    %40 = math.exp %39 : vector<2x128xf32>
    %cst_17 = arith.constant 1.000000e+00 : f32
    %41 = vector.broadcast %cst_17 : f32 to vector<2x128xf32>
    %42 = arith.addf %41, %40 : vector<2x128xf32>
    %43 = arith.divf %41, %42 : vector<2x128xf32>
    %c0_18 = arith.constant 0 : index
    %c384_19 = arith.constant 384 : index
    %44 = vector.load %arg3[%c0_18, %c384_19] : memref<2x1024xf32, #tpu.memory_space<vmem>>, vector<2x128xf32>
    %45 = arith.mulf %43, %44 : vector<2x128xf32>
    %46 = arith.addf %35, %45 : vector<2x128xf32>
    %47 = arith.addf %43, %44 : vector<2x128xf32>
    %48 = arith.addf %37, %47 : vector<2x128xf32>
    %c0_20 = arith.constant 0 : index
    %c512 = arith.constant 512 : index
    %49 = vector.load %arg2[%c0_20, %c512] : memref<2x1024xf32, #tpu.memory_space<vmem>>, vector<2x128xf32>
    %50 = arith.negf %49 : vector<2x128xf32>
    %51 = math.exp %50 : vector<2x128xf32>
    %cst_21 = arith.constant 1.000000e+00 : f32
    %52 = vector.broadcast %cst_21 : f32 to vector<2x128xf32>
    %53 = arith.addf %52, %51 : vector<2x128xf32>
    %54 = arith.divf %52, %53 : vector<2x128xf32>
    %c0_22 = arith.constant 0 : index
    %c512_23 = arith.constant 512 : index
    %55 = vector.load %arg3[%c0_22, %c512_23] : memref<2x1024xf32, #tpu.memory_space<vmem>>, vector<2x128xf32>
    %56 = arith.mulf %54, %55 : vector<2x128xf32>
    %57 = arith.addf %46, %56 : vector<2x128xf32>
    %58 = arith.addf %54, %55 : vector<2x128xf32>
    %59 = arith.addf %48, %58 : vector<2x128xf32>
    %c0_24 = arith.constant 0 : index
    %c640 = arith.constant 640 : index
    %60 = vector.load %arg2[%c0_24, %c640] : memref<2x1024xf32, #tpu.memory_space<vmem>>, vector<2x128xf32>
    %61 = arith.negf %60 : vector<2x128xf32>
    %62 = math.exp %61 : vector<2x128xf32>
    %cst_25 = arith.constant 1.000000e+00 : f32
    %63 = vector.broadcast %cst_25 : f32 to vector<2x128xf32>
    %64 = arith.addf %63, %62 : vector<2x128xf32>
    %65 = arith.divf %63, %64 : vector<2x128xf32>
    %c0_26 = arith.constant 0 : index
    %c640_27 = arith.constant 640 : index
    %66 = vector.load %arg3[%c0_26, %c640_27] : memref<2x1024xf32, #tpu.memory_space<vmem>>, vector<2x128xf32>
    %67 = arith.mulf %65, %66 : vector<2x128xf32>
    %68 = arith.addf %57, %67 : vector<2x128xf32>
    %69 = arith.addf %65, %66 : vector<2x128xf32>
    %70 = arith.addf %59, %69 : vector<2x128xf32>
    %c0_28 = arith.constant 0 : index
    %c768 = arith.constant 768 : index
    %71 = vector.load %arg2[%c0_28, %c768] : memref<2x1024xf32, #tpu.memory_space<vmem>>, vector<2x128xf32>
    %72 = arith.negf %71 : vector<2x128xf32>
    %73 = math.exp %72 : vector<2x128xf32>
    %cst_29 = arith.constant 1.000000e+00 : f32
    %74 = vector.broadcast %cst_29 : f32 to vector<2x128xf32>
    %75 = arith.addf %74, %73 : vector<2x128xf32>
    %76 = arith.divf %74, %75 : vector<2x128xf32>
    %c0_30 = arith.constant 0 : index
    %c768_31 = arith.constant 768 : index
    %77 = vector.load %arg3[%c0_30, %c768_31] : memref<2x1024xf32, #tpu.memory_space<vmem>>, vector<2x128xf32>
    %78 = arith.mulf %76, %77 : vector<2x128xf32>
    %79 = arith.addf %68, %78 : vector<2x128xf32>
    %80 = arith.addf %76, %77 : vector<2x128xf32>
    %81 = arith.addf %70, %80 : vector<2x128xf32>
    %c0_32 = arith.constant 0 : index
    %c896 = arith.constant 896 : index
    %82 = vector.load %arg2[%c0_32, %c896] : memref<2x1024xf32, #tpu.memory_space<vmem>>, vector<2x128xf32>
    %83 = arith.negf %82 : vector<2x128xf32>
    %84 = math.exp %83 : vector<2x128xf32>
    %cst_33 = arith.constant 1.000000e+00 : f32
    %85 = vector.broadcast %cst_33 : f32 to vector<2x128xf32>
    %86 = arith.addf %85, %84 : vector<2x128xf32>
    %87 = arith.divf %85, %86 : vector<2x128xf32>
    %c0_34 = arith.constant 0 : index
    %c896_35 = arith.constant 896 : index
    %88 = vector.load %arg3[%c0_34, %c896_35] : memref<2x1024xf32, #tpu.memory_space<vmem>>, vector<2x128xf32>
    %89 = arith.mulf %87, %88 : vector<2x128xf32>
    %90 = arith.addf %79, %89 : vector<2x128xf32>
    %91 = arith.addf %87, %88 : vector<2x128xf32>
    %92 = arith.addf %81, %91 : vector<2x128xf32>
    %c0_36 = arith.constant 0 : index
    %c0_37 = arith.constant 0 : index
    %93 = vector.load %arg5[%c0_36, %c0_37] : memref<2x128xf32, #tpu.memory_space<vmem>>, vector<2x128xf32>
    tpu.vector_store %arg5[%c0_36, %c0_37], %90 {strides = array<i32>} : memref<2x128xf32, #tpu.memory_space<vmem>>, vector<2x128xf32>,
    %c0_38 = arith.constant 0 : index
    %c0_39 = arith.constant 0 : index
    %94 = vector.load %arg6[%c0_38, %c0_39] : memref<2x128xf32, #tpu.memory_space<vmem>>, vector<2x128xf32>
    tpu.vector_store %arg6[%c0_38, %c0_39], %92 {strides = array<i32>} : memref<2x128xf32, #tpu.memory_space<vmem>>, vector<2x128xf32>,
    %c0_i32_40 = arith.constant 0 : i32
    %95 = arith.cmpi eq, %arg1, %c0_i32_40 : i32
    %96 = arith.extui %95 : i1 to i32
    %c0_i32_41 = arith.constant 0 : i32
    %97 = arith.cmpi ne, %96, %c0_i32_41 : i32
    scf.if %97 {
      %c0_42 = arith.constant 0 : index
      %c0_43 = arith.constant 0 : index
      %98 = vector.load %arg5[%c0_42, %c0_43] : memref<2x128xf32, #tpu.memory_space<vmem>>, vector<2x128xf32>
      %cst_44 = arith.constant dense<0.000000e+00> : vector<2xf32>
      %99 = vector.multi_reduction <add>, %98, %cst_44 [1] : vector<2x128xf32> to vector<2xf32>
      %100 = vector.shape_cast %99 : vector<2xf32> to vector<2x1xf32>
      %c0_45 = arith.constant 0 : index
      %c0_46 = arith.constant 0 : index
      %101 = vector.load %arg6[%c0_45, %c0_46] : memref<2x128xf32, #tpu.memory_space<vmem>>, vector<2x128xf32>
      %cst_47 = arith.constant dense<0.000000e+00> : vector<2xf32>
      %102 = vector.multi_reduction <add>, %101, %cst_47 [1] : vector<2x128xf32> to vector<2xf32>
      %103 = vector.shape_cast %102 : vector<2xf32> to vector<2x1xf32>
      %cst_48 = arith.constant 1.000000e-03 : f32
      %104 = vector.broadcast %cst_48 : f32 to vector<2x1xf32>
      %105 = arith.addf %100, %104 : vector<2x1xf32>
      %cst_49 = arith.constant 2.000000e+00 : f32
      %106 = vector.broadcast %cst_49 : f32 to vector<2x1xf32>
      %107 = arith.mulf %106, %105 : vector<2x1xf32>
      %cst_50 = arith.constant 1.000000e-03 : f32
      %108 = vector.broadcast %cst_50 : f32 to vector<2x1xf32>
      %109 = arith.addf %103, %108 : vector<2x1xf32>
      %110 = arith.divf %107, %109 : vector<2x1xf32>
      %c0_51 = arith.constant 0 : index
      %c0_52 = arith.constant 0 : index
      %111 = vector.load %arg4[%c0_51, %c0_52] : memref<2x1xf32, #tpu.memory_space<vmem>>, vector<2x1xf32>
      tpu.vector_store %arg4[%c0_51, %c0_52], %110 {strides = array<i32>} : memref<2x1xf32, #tpu.memory_space<vmem>>, vector<2x1xf32>,
    } else {
    }
    return
  }
  func.func @transform_0(%arg0: i32, %arg1: i32) -> (i32, i32) {
    %c0_i32 = arith.constant 0 : i32
    return %arg0, %arg1 : i32, i32
  }
  func.func @transform_1(%arg0: i32, %arg1: i32) -> (i32, i32) {
    %c0_i32 = arith.constant 0 : i32
    return %arg0, %arg1 : i32, i32
  }
  func.func @transform_2(%arg0: i32, %arg1: i32) -> (i32, i32) {
    %c0_i32 = arith.constant 0 : i32
    %c0_i32_0 = arith.constant 0 : i32
    return %arg0, %c0_i32 : i32, i32
  }
}

</mosaic_0001>

<llo_original>
// kernel: tpu_custom_call.1
$region0: #{tpu_custom_call.1}
  #allocation0 [shape = 'u32[]', space=smem, size = 0x4, offset = 0x4, fixed_abs, tag = 'smem constant byte address 0x4 - core index']
  #allocation1 [shape = 'u32[72,128]{1,0:T(1,128)}', space=vmem, size = 0x9000, scoped, tag = 'internal scratch']
  #allocation2 [shape = 'f32[2,128]{1,0:T(2,128)}', space=vmem, size = 0x400, scoped, tag = 'scratch operand']
  #allocation3 [shape = 'f32[2,128]{1,0:T(2,128)}', space=vmem, size = 0x400, scoped, tag = 'scratch operand']
  %s0 = inlined_call_operand.hbm [shape: f32[2,1024], index: 0, kind: input, shape index: {}]
  %s1 = inlined_call_operand.hbm [shape: f32[2,1024], index: 1, kind: input, shape index: {}]
  %s2 = inlined_call_operand.vmem [shape: f32[2,1], index: 2, kind: output, shape index: {}]
  %s3 = sld [smem:[#allocation0]]
  $region34: #{tpu_custom_call.1} parent=0
    _
  %s5 = ssub.s32 1, %s3
  %s6 = scalar_select 0, %s5, %s3
  $region1: #{tpu_custom_call.1} parent=0
    #allocation4 [shape = 'u8[8192]{0}', space=vmem, size = 0x2000, scoped, tag = 'input window, operand 0, single buffered']
    #allocation5 [shape = 's32[1]{0}', space=sflag, size = 0x4, scoped, tag = 'scoped memory for tpu_custom_call.1']
    #allocation6 [shape = 'u8[8192]{0}', space=vmem, size = 0x2000, scoped, tag = 'input window, operand 1, single buffered']
    #allocation7 [shape = 's32[1]{0}', space=sflag, size = 0x4, scoped, tag = 'scoped memory for tpu_custom_call.1']
    %7 = vsyncpa [#allocation5], 0
    %8 = vsyncpa [#allocation7], 0
    // Predicated region
    $region2: #{tpu_custom_call.1} parent=1 // pred_check
      _
    $region3: #{tpu_custom_call.1} parent=1 // pred_check_branch
      %10 = sbr.rel (0) target = $region5
    $region4: #{tpu_custom_call.1} parent=1 // pred_region
      %12 = vsyncadd [#allocation5], 0
      %s14 = sshll.u32 %s0, 4
      %s15 = int_to_ptr.hbm [resolvable:$true] %s14
      %s16 = sshll.u32 [#allocation4], 4
      %s17 = int_to_ptr.vmem [resolvable:$true] %s16
      %19 = dma.hbm_to_vmem [thread:$0]  %s15, 256, %s17, [#allocation5]
    $region5: #{tpu_custom_call.1} parent=1 // pred_fallthru
      _
    // Predicated region
    $region6: #{tpu_custom_call.1} parent=1 // pred_check
      _
    $region7: #{tpu_custom_call.1} parent=1 // pred_check_branch
      %21 = sbr.rel (0) target = $region9
    $region8: #{tpu_custom_call.1} parent=1 // pred_region
      %23 = vsyncadd [#allocation7], 0
      %s25 = sshll.u32 %s1, 4
      %s26 = int_to_ptr.hbm [resolvable:$true] %s25
      %s27 = sshll.u32 [#allocation6], 4
      %s28 = int_to_ptr.vmem [resolvable:$true] %s27
      %30 = dma.hbm_to_vmem [thread:$0]  %s26, 256, %s28, [#allocation7]
    $region9: #{tpu_custom_call.1} parent=1 // pred_fallthru
      _
    // Predicated region
    $region10: #{tpu_custom_call.1} parent=1 // pred_check
      _
    $region11: #{tpu_custom_call.1} parent=1 // pred_check_branch
      %32 = sbr.rel (0) target = $region13
    $region12: #{tpu_custom_call.1} parent=1 // pred_region
      %34 = dma.done [#allocation5], 256
    $region13: #{tpu_custom_call.1} parent=1 // pred_fallthru
      _
    // Predicated region
    $region14: #{tpu_custom_call.1} parent=1 // pred_check
      _
    $region15: #{tpu_custom_call.1} parent=1 // pred_check_branch
      %36 = sbr.rel (0) target = $region17
    $region16: #{tpu_custom_call.1} parent=1 // pred_region
      %38 = dma.done [#allocation7], 256
    $region17: #{tpu_custom_call.1} parent=1 // pred_fallthru
      _
    %p39 = scmp.eq.s32.totalorder 0, 0
    // Predicated region
    $region18: #{tpu_custom_call.1} parent=1 // pred_check
      %p40 = pneg %p39
    $region19: #{tpu_custom_call.1} parent=1 // pred_check_branch
      %42 = sbr.rel (%p40) target = $region21
    $region20: #{tpu_custom_call.1} parent=1 // pred_region
      %43 = vst [vmem:[#allocation2] sm:$0x3] 0.0
      %44 = vst [vmem:[#allocation3] sm:$0x3] 0.0
    $region21: #{tpu_custom_call.1} parent=1 // pred_fallthru
      _
    %v45 = vld [vmem:[#allocation2] sm:$0x3]
    %v46 = vld [vmem:[#allocation3] sm:$0x3]
    %v47 = vld [vmem:[#allocation4] sm:$0x3]
    %v48 = vxor.u32 %v47, 2147483648
    %v49 = vmul.f32 %v48, 1.442695
    %v50 = vpow.pop %v49
    %v51 = vadd.f32 %v50, 1.0
    %v52 = vrcp.pop %v51
    %v53 = vmul.f32 %v51, %v52
    %v54 = vsub.f32 1.0, %v53
    %v55 = vmul.f32 %v52, %v54
    %v56 = vadd.f32 %v52, %v55
    %vm57 = vweird.f32 %v51
    %vm58 = vweird.f32 %v52
    %vm59 = vmor %vm57, %vm58
    %v60 = vsel %vm59, %v52, %v56
    %v61 = vand.u32 2147483647, %v51
    %vm62 = vcmp.eq.f32.partialorder %v61, 8.507059e+37
    %v63 = vand.u32 %v51, 2147483648
    %v64 = vor.u32 1.1754944e-38, %v63
    %v65 = vsel %vm62, %v64, %v60
    %v66 = vmul.f32 1.0, %v65
    %v67 = vld [vmem:[#allocation6] sm:$0x3]
    %v68 = vmul.f32 %v66, %v67
    %v69 = vadd.f32 %v45, %v68
    %v70 = vadd.f32 %v66, %v67
    %v71 = vadd.f32 %v46, %v70
    %v72 = vld [vmem:[#allocation4 + $0x2] sm:$0x3]
    %v73 = vxor.u32 %v72, 2147483648
    %v74 = vmul.f32 %v73, 1.442695
    %v75 = vpow.pop %v74
    %v76 = vadd.f32 %v75, 1.0
    %v77 = vrcp.pop %v76
    %v78 = vmul.f32 %v76, %v77
    %v79 = vsub.f32 1.0, %v78
    %v80 = vmul.f32 %v77, %v79
    %v81 = vadd.f32 %v77, %v80
    %vm82 = vweird.f32 %v76
    %vm83 = vweird.f32 %v77
    %vm84 = vmor %vm82, %vm83
    %v85 = vsel %vm84, %v77, %v81
    %v86 = vand.u32 2147483647, %v76
    %vm87 = vcmp.eq.f32.partialorder %v86, 8.507059e+37
    %v88 = vand.u32 %v76, 2147483648
    %v89 = vor.u32 1.1754944e-38, %v88
    %v90 = vsel %vm87, %v89, %v85
    %v91 = vmul.f32 1.0, %v90
    %v92 = vld [vmem:[#allocation6 + $0x2] sm:$0x3]
    %v93 = vmul.f32 %v91, %v92
    %v94 = vadd.f32 %v69, %v93
    %v95 = vadd.f32 %v91, %v92
    %v96 = vadd.f32 %v71, %v95
    %v97 = vld [vmem:[#allocation4 + $0x4] sm:$0x3]
    %v98 = vxor.u32 %v97, 2147483648
    %v99 = vmul.f32 %v98, 1.442695
    %v100 = vpow.pop %v99
    %v101 = vadd.f32 %v100, 1.0
    %v102 = vrcp.pop %v101
    %v103 = vmul.f32 %v101, %v102
    %v104 = vsub.f32 1.0, %v103
    %v105 = vmul.f32 %v102, %v104
    %v106 = vadd.f32 %v102, %v105
    %vm107 = vweird.f32 %v101
    %vm108 = vweird.f32 %v102
    %vm109 = vmor %vm107, %vm108
    %v110 = vsel %vm109, %v102, %v106
    %v111 = vand.u32 2147483647, %v101
    %vm112 = vcmp.eq.f32.partialorder %v111, 8.507059e+37
    %v113 = vand.u32 %v101, 2147483648
    %v114 = vor.u32 1.1754944e-38, %v113
    %v115 = vsel %vm112, %v114, %v110
    %v116 = vmul.f32 1.0, %v115
    %v117 = vld [vmem:[#allocation6 + $0x4] sm:$0x3]
    %v118 = vmul.f32 %v116, %v117
    %v119 = vadd.f32 %v94, %v118
    %v120 = vadd.f32 %v116, %v117
    %v121 = vadd.f32 %v96, %v120
    %v122 = vld [vmem:[#allocation4 + $0x6] sm:$0x3]
    %v123 = vxor.u32 %v122, 2147483648
    %v124 = vmul.f32 %v123, 1.442695
    %v125 = vpow.pop %v124
    %v126 = vadd.f32 %v125, 1.0
    %v127 = vrcp.pop %v126
    %v128 = vmul.f32 %v126, %v127
    %v129 = vsub.f32 1.0, %v128
    %v130 = vmul.f32 %v127, %v129
    %v131 = vadd.f32 %v127, %v130
    %vm132 = vweird.f32 %v126
    %vm133 = vweird.f32 %v127
    %vm134 = vmor %vm132, %vm133
    %v135 = vsel %vm134, %v127, %v131
    %v136 = vand.u32 2147483647, %v126
    %vm137 = vcmp.eq.f32.partialorder %v136, 8.507059e+37
    %v138 = vand.u32 %v126, 2147483648
    %v139 = vor.u32 1.1754944e-38, %v138
    %v140 = vsel %vm137, %v139, %v135
    %v141 = vmul.f32 1.0, %v140
    %v142 = vld [vmem:[#allocation6 + $0x6] sm:$0x3]
    %v143 = vmul.f32 %v141, %v142
    %v144 = vadd.f32 %v119, %v143
    %v145 = vadd.f32 %v141, %v142
    %v146 = vadd.f32 %v121, %v145
    %v147 = vld [vmem:[#allocation4 + $0x8] sm:$0x3]
    %v148 = vxor.u32 %v147, 2147483648
    %v149 = vmul.f32 %v148, 1.442695
    %v150 = vpow.pop %v149
    %v151 = vadd.f32 %v150, 1.0
    %v152 = vrcp.pop %v151
    %v153 = vmul.f32 %v151, %v152
    %v154 = vsub.f32 1.0, %v153
    %v155 = vmul.f32 %v152, %v154
    %v156 = vadd.f32 %v152, %v155
    %vm157 = vweird.f32 %v151
    %vm158 = vweird.f32 %v152
    %vm159 = vmor %vm157, %vm158
    %v160 = vsel %vm159, %v152, %v156
    %v161 = vand.u32 2147483647, %v151
    %vm162 = vcmp.eq.f32.partialorder %v161, 8.507059e+37
    %v163 = vand.u32 %v151, 2147483648
    %v164 = vor.u32 1.1754944e-38, %v163
    %v165 = vsel %vm162, %v164, %v160
    %v166 = vmul.f32 1.0, %v165
    %v167 = vld [vmem:[#allocation6 + $0x8] sm:$0x3]
    %v168 = vmul.f32 %v166, %v167
    %v169 = vadd.f32 %v144, %v168
    %v170 = vadd.f32 %v166, %v167
    %v171 = vadd.f32 %v146, %v170
    %v172 = vld [vmem:[#allocation4 + $0xa] sm:$0x3]
    %v173 = vxor.u32 %v172, 2147483648
    %v174 = vmul.f32 %v173, 1.442695
    %v175 = vpow.pop %v174
    %v176 = vadd.f32 %v175, 1.0
    %v177 = vrcp.pop %v176
    %v178 = vmul.f32 %v176, %v177
    %v179 = vsub.f32 1.0, %v178
    %v180 = vmul.f32 %v177, %v179
    %v181 = vadd.f32 %v177, %v180
    %vm182 = vweird.f32 %v176
    %vm183 = vweird.f32 %v177
    %vm184 = vmor %vm182, %vm183
    %v185 = vsel %vm184, %v177, %v181
    %v186 = vand.u32 2147483647, %v176
    %vm187 = vcmp.eq.f32.partialorder %v186, 8.507059e+37
    %v188 = vand.u32 %v176, 2147483648
    %v189 = vor.u32 1.1754944e-38, %v188
    %v190 = vsel %vm187, %v189, %v185
    %v191 = vmul.f32 1.0, %v190
    %v192 = vld [vmem:[#allocation6 + $0xa] sm:$0x3]
    %v193 = vmul.f32 %v191, %v192
    %v194 = vadd.f32 %v169, %v193
    %v195 = vadd.f32 %v191, %v192
    %v196 = vadd.f32 %v171, %v195
    %v197 = vld [vmem:[#allocation4 + $0xc] sm:$0x3]
    %v198 = vxor.u32 %v197, 2147483648
    %v199 = vmul.f32 %v198, 1.442695
    %v200 = vpow.pop %v199
    %v201 = vadd.f32 %v200, 1.0
    %v202 = vrcp.pop %v201
    %v203 = vmul.f32 %v201, %v202
    %v204 = vsub.f32 1.0, %v203
    %v205 = vmul.f32 %v202, %v204
    %v206 = vadd.f32 %v202, %v205
    %vm207 = vweird.f32 %v201
    %vm208 = vweird.f32 %v202
    %vm209 = vmor %vm207, %vm208
    %v210 = vsel %vm209, %v202, %v206
    %v211 = vand.u32 2147483647, %v201
    %vm212 = vcmp.eq.f32.partialorder %v211, 8.507059e+37
    %v213 = vand.u32 %v201, 2147483648
    %v214 = vor.u32 1.1754944e-38, %v213
    %v215 = vsel %vm212, %v214, %v210
    %v216 = vmul.f32 1.0, %v215
    %v217 = vld [vmem:[#allocation6 + $0xc] sm:$0x3]
    %v218 = vmul.f32 %v216, %v217
    %v219 = vadd.f32 %v194, %v218
    %v220 = vadd.f32 %v216, %v217
    %v221 = vadd.f32 %v196, %v220
    %v222 = vld [vmem:[#allocation4 + $0xe] sm:$0x3]
    %v223 = vxor.u32 %v222, 2147483648
    %v224 = vmul.f32 %v223, 1.442695
    %v225 = vpow.pop %v224
    %v226 = vadd.f32 %v225, 1.0
    %v227 = vrcp.pop %v226
    %v228 = vmul.f32 %v226, %v227
    %v229 = vsub.f32 1.0, %v228
    %v230 = vmul.f32 %v227, %v229
    %v231 = vadd.f32 %v227, %v230
    %vm232 = vweird.f32 %v226
    %vm233 = vweird.f32 %v227
    %vm234 = vmor %vm232, %vm233
    %v235 = vsel %vm234, %v227, %v231
    %v236 = vand.u32 2147483647, %v226
    %vm237 = vcmp.eq.f32.partialorder %v236, 8.507059e+37
    %v238 = vand.u32 %v226, 2147483648
    %v239 = vor.u32 1.1754944e-38, %v238
    %v240 = vsel %vm237, %v239, %v235
    %v241 = vmul.f32 1.0, %v240
    %v242 = vld [vmem:[#allocation6 + $0xe] sm:$0x3]
    %v243 = vmul.f32 %v241, %v242
    %v244 = vadd.f32 %v219, %v243
    %v245 = vadd.f32 %v241, %v242
    %v246 = vadd.f32 %v221, %v245
    %247 = vst [vmem:[#allocation2] sm:$0x3] %v244
    %248 = vst [vmem:[#allocation3] sm:$0x3] %v246
    // Predicated region
    $region22: #{tpu_custom_call.1} parent=1 // pred_check
      %p249 = pneg %p39
    $region23: #{tpu_custom_call.1} parent=1 // pred_check_branch
      %251 = sbr.rel (%p249) target = $region25
    $region24: #{tpu_custom_call.1} parent=1 // pred_region
      %v252 = vld [vmem:[#allocation2] sm:$0x3]
      %vm253 = vcmask 1041408
      %v254 = vsel %vm253, %v252, 0.0
      %255 = vadd.xlane.f32.xlu0 %v254
      %v256 = vpop.xlane.xlu0 %255
      %v257 = vld [vmem:[#allocation3] sm:$0x3]
      %v258 = vsel %vm253, %v257, 0.0
      %259 = vadd.xlane.f32.xlu0 %v258
      %v260 = vpop.xlane.xlu0 %259
      %v261 = vadd.f32 %v256, 0.001
      %v262 = vmul.f32 %v261, 2.0
      %v263 = vadd.f32 %v260, 0.001
      %v264 = vrcp.pop %v263
      %v265 = vmul.f32 %v263, %v264
      %v266 = vsub.f32 1.0, %v265
      %v267 = vmul.f32 %v264, %v266
      %v268 = vadd.f32 %v264, %v267
      %vm269 = vweird.f32 %v263
      %vm270 = vweird.f32 %v264
      %vm271 = vmor %vm269, %vm270
      %v272 = vsel %vm271, %v264, %v268
      %v273 = vand.u32 2147483647, %v263
      %vm274 = vcmp.eq.f32.partialorder %v273, 8.507059e+37
      %v275 = vand.u32 %v263, 2147483648
      %v276 = vor.u32 1.1754944e-38, %v275
      %v277 = vsel %vm274, %v276, %v272
      %v278 = vmul.f32 %v262, %v277
      %vm279 = vcmask 1024
      %280 = vst.msk [vmem:[%s2] sm:$0x3] %vm279, %v278
    $region25: #{tpu_custom_call.1} parent=1 // pred_fallthru
      _
    // Predicated region
    $region26: #{tpu_custom_call.1} parent=1 // pred_check
      _
    $region27: #{tpu_custom_call.1} parent=1 // pred_check_branch
      %282 = sbr.rel (0) target = $region29
    $region28: #{tpu_custom_call.1} parent=1 // pred_region
      _
    $region29: #{tpu_custom_call.1} parent=1 // pred_fallthru
      _
    // Predicated region
    $region30: #{tpu_custom_call.1} parent=1 // pred_check
      _
    $region31: #{tpu_custom_call.1} parent=1 // pred_check_branch
      %284 = sbr.rel (0) target = $region33
    $region32: #{tpu_custom_call.1} parent=1 // pred_region
      _
    $region33: #{tpu_custom_call.1} parent=1 // pred_fallthru
      _
    %285 = vsyncpa [#allocation5], 1
    %286 = vsyncpa [#allocation7], 1

</llo_original>
